<compile_context>
chip_gen: v7x
topology: tpu7x:2x2x1
jax: 0.10.0
libtpu: 0.0.40
codegen_flags: <defaults>
</compile_context>

<pallas_src>
import math

import numpy as np
import jax
import jax.numpy as jnp
from jax.experimental import pallas as pl
from jax.experimental.pallas import tpu as pltpu


def _masked_edge_attn_kernel(m_ref, w_ref, edge_ref, out_ref):
    # m_ref    : (S, Bt, D)  f32   VMEM   (native PyTorch layout of M)
    # w_ref    : (L, D)      f32   VMEM   (nn.Linear weight, native layout)
    # edge_ref : (S, Bt, L)  int8  VMEM   (1 at edges, 0 elsewhere)
    # out_ref  : (S, Bt, L)  f32   VMEM
    S, Bt, D = m_ref.shape
    L = w_ref.shape[0]

    # One folded MXU matmul for the whole batch tile:
    #   (S*Bt, D) x (L, D)^T -> (S*Bt, L); contraction on D (W stays (L, D)).
    # The leading-dim reshapes are layout-free when Bt is a multiple of 8 (or,
    # as in the demo, the whole problem is one tiny tile).
    m2 = m_ref[...].reshape(S * Bt, D)
    scale = jax.lax.dot_general(
        m2, w_ref[...],
        dimension_numbers=(((1,), (1,)), ((), ())),
        preferred_element_type=jnp.float32,
    ).reshape(S, Bt, L)

    # softmax over seq_len (PyTorch dim 0).  Axis 0 is the outermost dim here,
    # so max/sum are plain cross-vreg VPU reductions (no XLU, no transpose).
    mx = jnp.max(scale, axis=0, keepdims=True)
    e = jnp.exp(scale - mx)
    denom = jnp.sum(e, axis=0, keepdims=True)
    # Approx (EUP) reciprocal is safe: the softmax denominator cancels exactly
    # in the renormalisation below.
    alpha = e * pl.reciprocal(denom, approx=True)

    # Reconstruct both PyTorch masks from the single int8 edge indicator.
    mc = edge_ref[...].astype(jnp.float32)          # mask_copy: 0 / 1
    mask = jnp.where(mc > 0.0, 1.0, 1e-10)          # mask:      1e-10 / 1
    masked = alpha * mask

    # Sum over seq_len == PyTorch sum over the last dim of (B, L, S).
    sums = jnp.sum(masked, axis=0, keepdims=True)
    # sums >= 1e-10 * max_s(alpha) > 0 by construction (mask never has exact
    # zeros), so no zero-guard is needed — same as the original module.
    out_ref[...] = masked * pl.reciprocal(sums, approx=False) * mc


def _pick_batch_tile(B, S, L, D, budget_bytes=8 << 20):
    """Largest batch tile (== B, or a multiple of 8) whose double-buffered block
    footprint stays under `budget_bytes` — ample headroom for v7x's 64 MiB
    physical VMEM (v5e/v6e have 128 MiB), so no vmem_limit override is needed."""
    def footprint(bt):
        io = 4 * S * bt * D + S * bt * L + 4 * S * bt * L   # M + int8 edge + out
        work = 4 * 4 * S * bt * L                            # f32 temporaries
        return 2 * io + work                                  # x2: double buffering
    if footprint(B) <= budget_bytes:
        return B
    for bt in range(8 * (B // 8), 7, -8):
        if footprint(bt) <= budget_bytes:
            return bt
    return 8


def masked_edge_attention(M, W_scalar, edge_mask_sbl, *, batch_tile=None):
    """M: (S, B, D) f32 (native PyTorch layout); W_scalar: (L, D) f32;
    edge_mask_sbl: (S, B, L) int8 edge indicator.  Returns (B, L, S) scores."""
    S, B, D = M.shape
    L = W_scalar.shape[0]
    Bt = batch_tile if batch_tile is not None else _pick_batch_tile(B, S, L, D)

    out_sbl = pl.pallas_call(
        _masked_edge_attn_kernel,
        out_shape=jax.ShapeDtypeStruct((S, B, L), jnp.float32),
        grid_spec=pltpu.PrefetchScalarGridSpec(
            num_scalar_prefetch=0,
            grid=(pl.cdiv(B, Bt),),
            in_specs=[
                pl.BlockSpec((S, Bt, D), lambda i: (0, i, 0)),   # M (native layout)
                pl.BlockSpec((L, D), lambda i: (0, 0)),          # W (native layout)
                pl.BlockSpec((S, Bt, L), lambda i: (0, i, 0)),   # int8 edge mask
            ],
            out_specs=pl.BlockSpec((S, Bt, L), lambda i: (0, i, 0)),
        ),
        compiler_params=pltpu.CompilerParams(
            # Batch tiles are independent -> v7x's 2 TensorCores can split them.
            dimension_semantics=("parallel",)),
    )(M.astype(jnp.float32), W_scalar.astype(jnp.float32),
      edge_mask_sbl.astype(jnp.int8))

    # Single cheap layout change on the final small f32 result to match the
    # PyTorch (batch, max_seq_len, seq_len) return contract.
    return jnp.transpose(out_sbl, (1, 2, 0))


def build_edge_mask(edge_ind, batch, max_seq_len, seq_len):
    """int8 edge indicator in the kernel's (seq_len, batch, max_seq_len) layout:
    edge_mask[j, b, i] == 1  <=>  (i, j) in edge_ind[b]  (the positions the
    PyTorch module sets to 1 in both `mask` and `mask_copy`).  Robust to empty
    per-batch edge lists."""
    m = np.zeros((seq_len, batch, max_seq_len), dtype=np.int8)
    for b, pairs in enumerate(edge_ind):
        for (i, j) in pairs:
            m[j, b, i] = 1
    return jnp.asarray(m)


def reference(M, W_scalar, edge_mask_bls):
    """Pure-JAX reference. edge_mask_bls: (B, L, S) float 0/1."""
    scale = jnp.einsum("sbd,ld->sbl", M, W_scalar)
    alpha = jax.nn.softmax(scale, axis=0)
    alpha = jnp.transpose(alpha, (1, 2, 0))                   # (B, L, S)
    mask = jnp.where(edge_mask_bls > 0, 1.0, 1e-10)
    masked = alpha * mask
    sums = jnp.sum(masked, axis=-1, keepdims=True)
    return masked / sums * edge_mask_bls


if __name__ == "__main__":
    key = jax.random.PRNGKey(0)
    input_dim = 32
    seq_len = 8
    max_seq_len = 8
    batch = 2

    k_m, k_w = jax.random.split(key)
    M = jax.random.normal(k_m, (seq_len, batch, input_dim), dtype=jnp.float32)
    # nn.Linear(input_dim, max_seq_len, bias=False) default init: U(-1/sqrt(in), 1/sqrt(in))
    stdv = 1.0 / math.sqrt(input_dim)
    W_scalar = jax.random.uniform(
        k_w, (max_seq_len, input_dim), dtype=jnp.float32, minval=-stdv, maxval=stdv)

    # Deterministic synthetic edges: node i connects to i and (i+1) % seq_len.
    edge_ind = [
        [(i, i) for i in range(seq_len)] + [(i, (i + 1) % seq_len) for i in range(seq_len)]
        for _ in range(batch)
    ]
    edge_mask_sbl = build_edge_mask(edge_ind, batch, max_seq_len, seq_len)  # (S,B,L) int8

    scores = masked_edge_attention(M, W_scalar, edge_mask_sbl)
    scores = jax.block_until_ready(scores)

    ref = reference(M, W_scalar,
                    jnp.transpose(edge_mask_sbl, (1, 2, 0)).astype(jnp.float32))
    assert scores.shape == (batch, max_seq_len, seq_len)
    assert jnp.allclose(scores, ref, atol=1e-5, rtol=1e-4), "mismatch vs reference"

    print("KERNEL_OK")
</pallas_src>

<mosaic_0001>
module attributes {stable_mosaic.version = 11 : i64} {
  func.func @_masked_edge_attn_kernel(%arg0: i32, %arg1: memref<8x2x32xf32, #tpu.memory_space<vmem>>, %arg2: memref<8x32xf32, #tpu.memory_space<vmem>>, %arg3: memref<8x2x8xi8, #tpu.memory_space<vmem>>, %arg4: memref<8x2x8xf32, #tpu.memory_space<vmem>>) attributes {dimension_semantics = [#tpu.dimension_semantics<parallel>], iteration_bounds = array<i64: 1>, scalar_prefetch = 0 : i64, scratch_operands = 0 : i64, tpu.core_type = #tpu.core_type<tc>, window_params = [{transform_indices = @transform_0, window_bounds = array<i64: 8, 2, 32>}, {pipeline_mode = #tpu.pipeline_mode<synchronous>, transform_indices = @transform_1, window_bounds = array<i64: 8, 32>}, {transform_indices = @transform_2, window_bounds = array<i64: 8, 2, 8>}, {transform_indices = @transform_3, window_bounds = array<i64: 8, 2, 8>}]} {
    %c0 = arith.constant 0 : index
    %c0_0 = arith.constant 0 : index
    %c0_1 = arith.constant 0 : index
    %0 = vector.load %arg1[%c0, %c0_0, %c0_1] : memref<8x2x32xf32, #tpu.memory_space<vmem>>, vector<8x2x32xf32>
    %1 = vector.shape_cast %0 : vector<8x2x32xf32> to vector<16x32xf32>
    %c0_2 = arith.constant 0 : index
    %c0_3 = arith.constant 0 : index
    %2 = vector.load %arg2[%c0_2, %c0_3] : memref<8x32xf32, #tpu.memory_space<vmem>>, vector<8x32xf32>
    %cst = arith.constant dense<0.000000e+00> : vector<16x8xf32>
    %3 = tpu.matmul %1, %2, %cst {dimension_numbers = #tpu.dot_dimension_numbers<[1], [1], [0], [0], [0, 0, 1, 0], [], []>} : vector<16x32xf32>, vector<8x32xf32>, vector<16x8xf32> -> vector<16x8xf32>
    %4 = vector.shape_cast %3 : vector<16x8xf32> to vector<8x2x8xf32>
    %cst_4 = arith.constant dense<0xFF800000> : vector<2x8xf32>
    %5 = vector.multi_reduction <maximumf>, %4, %cst_4 [0] : vector<8x2x8xf32> to vector<2x8xf32>
    %6 = vector.shape_cast %5 : vector<2x8xf32> to vector<1x2x8xf32>
    %7 = vector.broadcast %6 : vector<1x2x8xf32> to vector<8x2x8xf32>
    %8 = arith.subf %4, %7 : vector<8x2x8xf32>
    %9 = math.exp %8 : vector<8x2x8xf32>
    %cst_5 = arith.constant dense<0.000000e+00> : vector<2x8xf32>
    %10 = vector.multi_reduction <add>, %9, %cst_5 [0] : vector<8x2x8xf32> to vector<2x8xf32>
    %11 = vector.shape_cast %10 : vector<2x8xf32> to vector<1x2x8xf32>
    %12 = tpu.reciprocal %11 {approx = true} : vector<1x2x8xf32> -> vector<1x2x8xf32>
    %13 = vector.broadcast %12 : vector<1x2x8xf32> to vector<8x2x8xf32>
    %14 = arith.mulf %9, %13 : vector<8x2x8xf32>
    %c0_6 = arith.constant 0 : index
    %c0_7 = arith.constant 0 : index
    %c0_8 = arith.constant 0 : index
    %15 = vector.load %arg3[%c0_6, %c0_7, %c0_8] : memref<8x2x8xi8, #tpu.memory_space<vmem>>, vector<8x2x8xi8>
    %16 = arith.sitofp %15 : vector<8x2x8xi8> to vector<8x2x8xf32>
    %cst_9 = arith.constant 0.000000e+00 : f32
    %17 = vector.broadcast %cst_9 : f32 to vector<8x2x8xf32>
    %18 = arith.cmpf ogt, %16, %17 : vector<8x2x8xf32>
    %cst_10 = arith.constant 1.000000e+00 : f32
    %cst_11 = arith.constant 1.000000e-10 : f32
    %19 = vector.broadcast %cst_10 : f32 to vector<8x2x8xf32>
    %20 = vector.broadcast %cst_11 : f32 to vector<8x2x8xf32>
    %21 = arith.select %18, %19, %20 : vector<8x2x8xi1>, vector<8x2x8xf32>
    %22 = arith.mulf %14, %21 : vector<8x2x8xf32>
    %cst_12 = arith.constant dense<0.000000e+00> : vector<2x8xf32>
    %23 = vector.multi_reduction <add>, %22, %cst_12 [0] : vector<8x2x8xf32> to vector<2x8xf32>
    %24 = vector.shape_cast %23 : vector<2x8xf32> to vector<1x2x8xf32>
    %25 = tpu.reciprocal %24 : vector<1x2x8xf32> -> vector<1x2x8xf32>
    %26 = vector.broadcast %25 : vector<1x2x8xf32> to vector<8x2x8xf32>
    %27 = arith.mulf %22, %26 : vector<8x2x8xf32>
    %28 = arith.mulf %27, %16 : vector<8x2x8xf32>
    %c0_13 = arith.constant 0 : index
    %c0_14 = arith.constant 0 : index
    %c0_15 = arith.constant 0 : index
    %29 = vector.load %arg4[%c0_13, %c0_14, %c0_15] : memref<8x2x8xf32, #tpu.memory_space<vmem>>, vector<8x2x8xf32>
    tpu.vector_store %arg4[%c0_13, %c0_14, %c0_15], %28 {strides = array<i32>} : memref<8x2x8xf32, #tpu.memory_space<vmem>>, vector<8x2x8xf32>,
    return
  }
  func.func @transform_0(%arg0: i32) -> (i32, i32, i32) {
    %c0_i32 = arith.constant 0 : i32
    %c0_i32_0 = arith.constant 0 : i32
    %c0_i32_1 = arith.constant 0 : i32
    return %c0_i32, %arg0, %c0_i32_0 : i32, i32, i32
  }
  func.func @transform_1(%arg0: i32) -> (i32, i32) {
    %c0_i32 = arith.constant 0 : i32
    %c0_i32_0 = arith.constant 0 : i32
    %c0_i32_1 = arith.constant 0 : i32
    return %c0_i32, %c0_i32_0 : i32, i32
  }
  func.func @transform_2(%arg0: i32) -> (i32, i32, i32) {
    %c0_i32 = arith.constant 0 : i32
    %c0_i32_0 = arith.constant 0 : i32
    %c0_i32_1 = arith.constant 0 : i32
    return %c0_i32, %arg0, %c0_i32_0 : i32, i32, i32
  }
  func.func @transform_3(%arg0: i32) -> (i32, i32, i32) {
    %c0_i32 = arith.constant 0 : i32
    %c0_i32_0 = arith.constant 0 : i32
    %c0_i32_1 = arith.constant 0 : i32
    return %c0_i32, %arg0, %c0_i32_0 : i32, i32, i32
  }
}

</mosaic_0001>

<llo_original>
// kernel: tpu_custom_call.1
$region0: #{tpu_custom_call.1}
  #allocation0 [shape = 'u32[]', space=smem, size = 0x4, offset = 0x4, fixed_abs, tag = 'smem constant byte address 0x4 - core index']
  #allocation1 [shape = 'u32[144,128]{1,0:T(1,128)}', space=vmem, size = 0x12000, scoped, tag = 'internal scratch']
  %s0 = inlined_call_operand.hbm [shape: f32[8,2,32], index: 0, kind: input, shape index: {}]
  %s1 = inlined_call_operand.vmem [shape: f32[8,32], index: 1, kind: input, shape index: {}]
  %s2 = inlined_call_operand.vmem [shape: s8[8,2,8], index: 2, kind: input, shape index: {}]
  %s3 = inlined_call_operand.hbm [shape: f32[8,2,8], index: 3, kind: output, shape index: {}]
  %s4 = sld [smem:[#allocation0]]
  $region26: #{tpu_custom_call.1} parent=0
    _
  %s6 = ssub.s32 1, %s4
  %s7 = scalar_select 0, %s6, %s4
  $region1: #{tpu_custom_call.1} parent=0
    #allocation2 [shape = 'u8[8192]{0}', space=vmem, size = 0x2000, scoped, tag = 'input window, operand 0, single buffered']
    #allocation3 [shape = 's32[1]{0}', space=sflag, size = 0x4, scoped, tag = 'scoped memory for tpu_custom_call.1']
    #allocation4 [shape = 's32[1]{0}', space=sflag, size = 0x4, scoped, tag = 'scoped memory for tpu_custom_call.1']
    #allocation5 [shape = 'u8[8192]{0}', space=vmem, size = 0x2000, scoped, tag = 'output window, operand 0, single buffered']
    %8 = vsyncpa [#allocation3], 0
    %9 = vsyncpa [#allocation4], 0
    // Predicated region
    $region2: #{tpu_custom_call.1} parent=1 // pred_check
      _
    $region3: #{tpu_custom_call.1} parent=1 // pred_check_branch
      %11 = sbr.rel (0) target = $region5
    $region4: #{tpu_custom_call.1} parent=1 // pred_region
      %s13 = ssub.s32 256, 256
      %14 = vsyncadd [#allocation3], %s13
      %s15 = sshll.u32 [#allocation2], 4
      %s16 = int_to_ptr.vmem [resolvable:$true] %s15
      %21 = dma.hbm_to_vmem [thread:$0]  %s0, 256, %s16, [#allocation3], 32, 32, 2
    $region5: #{tpu_custom_call.1} parent=1 // pred_fallthru
      _
    // Predicated region
    $region6: #{tpu_custom_call.1} parent=1 // pred_check
      _
    $region7: #{tpu_custom_call.1} parent=1 // pred_check_branch
      %23 = sbr.rel (0) target = $region9
    $region8: #{tpu_custom_call.1} parent=1 // pred_region
      _
    $region9: #{tpu_custom_call.1} parent=1 // pred_fallthru
      _
    // Predicated region
    $region10: #{tpu_custom_call.1} parent=1 // pred_check
      _
    $region11: #{tpu_custom_call.1} parent=1 // pred_check_branch
      %25 = sbr.rel (0) target = $region13
    $region12: #{tpu_custom_call.1} parent=1 // pred_region
      _
    $region13: #{tpu_custom_call.1} parent=1 // pred_fallthru
      _
    // Predicated region
    $region14: #{tpu_custom_call.1} parent=1 // pred_check
      _
    $region15: #{tpu_custom_call.1} parent=1 // pred_check_branch
      %27 = sbr.rel (0) target = $region17
    $region16: #{tpu_custom_call.1} parent=1 // pred_region
      %28 = dma.done [#allocation3], 256
    $region17: #{tpu_custom_call.1} parent=1 // pred_fallthru
      _
    %v29 = vld [vmem:[#allocation2] sm:$0x3]
    %v30 = vld [vmem:[#allocation2 + $0x2] sm:$0x3]
    %v31 = vld [vmem:[#allocation2 + $0x4] sm:$0x3]
    %v32 = vld [vmem:[#allocation2 + $0x6] sm:$0x3]
    %v33 = vld [vmem:[#allocation2 + $0x8] sm:$0x3]
    %v34 = vld [vmem:[#allocation2 + $0xa] sm:$0x3]
    %v35 = vld [vmem:[#allocation2 + $0xc] sm:$0x3]
    %v36 = vld [vmem:[#allocation2 + $0xe] sm:$0x3]
    %v37 = vld [vmem:[%s1] sm:$0xff]
    %v46 = vcombine.low %v29, %v30
    %v47 = vcombine.low %v31, %v32
    %v49 = vunpack.c.l.s4 1983009808
    %v50 = vunpack.c.0.s8 %v49
    %v51 = vlaneseq
    %v52 = vshrl.u32 %v51, 7
    %v53 = vsub.s32 %v50, %v52
    %v54 = vrot.slane %v46, %v53
    %v56 = vunpack.c.l.s4 1983009808
    %v57 = vunpack.c.0.s8 %v56
    %v58 = vlaneseq
    %v59 = vshrl.u32 %v58, 7
    %v60 = vsub.s32 %v57, %v59
    %v61 = vrot.slane %v47, %v60
    %v62 = vcombine.low %v54, %v61
    %v63 = vcombine.low %v33, %v34
    %v64 = vcombine.low %v35, %v36
    %v66 = vunpack.c.l.s4 1983009808
    %v67 = vunpack.c.0.s8 %v66
    %v68 = vlaneseq
    %v69 = vshrl.u32 %v68, 7
    %v70 = vsub.s32 %v67, %v69
    %v71 = vrot.slane %v63, %v70
    %v73 = vunpack.c.l.s4 1983009808
    %v74 = vunpack.c.0.s8 %v73
    %v75 = vlaneseq
    %v76 = vshrl.u32 %v75, 7
    %v77 = vsub.s32 %v74, %v76
    %v78 = vrot.slane %v64, %v77
    %v79 = vcombine.low %v71, %v78
    %vm80 = vcmask 261120
    %v81 = vsel %vm80, %v62, 0
    %v83 = vsel %vm80, %v79, 0
    %v86 = vsel %vm80, %v37, 0
    %88 = vmatprep.subr.mxu0 0.0
    %89 = vmatpush1.xpose.msra.mxu0 %v86
    %90 = vmatprep.subr.mxu0 0.0
    %91 = vmatpush1.xpose.msra.mxu0 0.0
    %92 = vmatprep.subr.mxu0 0.0
    %93 = vmatpush1.xpose.msra.mxu0 0.0
    %94 = vmatprep.subr.mxu0 0.0
    %95 = vmatpush1.xpose.msra.mxu0 0.0
    %96 = vmatprep.subr.mxu0 0.0
    %97 = vmatpush1.xpose.msra.mxu0 0.0
    %98 = vmatprep.subr.mxu0 0.0
    %99 = vmatpush1.xpose.msra.mxu0 0.0
    %100 = vmatprep.subr.mxu0 0.0
    %101 = vmatpush1.xpose.msra.mxu0 0.0
    %102 = vmatprep.subr.mxu0 0.0
    %103 = vmatpush1.xpose.msra.mxu0 0.0
    %104 = vmatprep.subr.mxu0 0.0
    %105 = vmatpush1.xpose.msra.mxu0 0.0
    %106 = vmatprep.subr.mxu0 0.0
    %107 = vmatpush1.xpose.msra.mxu0 0.0
    %108 = vmatprep.subr.mxu0 0.0
    %109 = vmatpush1.xpose.msra.mxu0 0.0
    %110 = vmatprep.subr.mxu0 0.0
    %111 = vmatpush1.xpose.msra.mxu0 0.0
    %112 = vmatprep.subr.mxu0 0.0
    %113 = vmatpush1.xpose.msra.mxu0 0.0
    %114 = vmatprep.subr.mxu0 0.0
    %115 = vmatpush1.xpose.msra.mxu0 0.0
    %116 = vmatprep.subr.mxu0 0.0
    %117 = vmatpush1.xpose.msra.mxu0 0.0
    %118 = vmatprep.subr.mxu0 0.0
    %119 = vmatpush1.xpose.msra.mxu0 0.0
    %120 = vmatprep.subr.mxu0 0.0
    %121 = vmatpush1.xpose.msra.mxu0 0.0
    %122 = vmatprep.subr.mxu0 0.0
    %123 = vmatpush1.xpose.msra.mxu0 0.0
    %124 = vmatprep.subr.mxu0 0.0
    %125 = vmatpush1.xpose.msra.mxu0 0.0
    %126 = vmatprep.subr.mxu0 0.0
    %127 = vmatpush1.xpose.msra.mxu0 0.0
    %128 = vmatprep.subr.mxu0 0.0
    %129 = vmatpush1.xpose.msra.mxu0 0.0
    %130 = vmatprep.subr.mxu0 0.0
    %131 = vmatpush1.xpose.msra.mxu0 0.0
    %132 = vmatprep.subr.mxu0 0.0
    %133 = vmatpush1.xpose.msra.mxu0 0.0
    %134 = vmatprep.subr.mxu0 0.0
    %135 = vmatpush1.xpose.msra.mxu0 0.0
    %136 = vmatprep.subr.mxu0 0.0
    %137 = vmatpush1.xpose.msra.mxu0 0.0
    %138 = vmatprep.subr.mxu0 0.0
    %139 = vmatpush1.xpose.msra.mxu0 0.0
    %140 = vmatprep.subr.mxu0 0.0
    %141 = vmatpush1.xpose.msra.mxu0 0.0
    %142 = vmatprep.subr.mxu0 0.0
    %143 = vmatpush1.xpose.msra.mxu0 0.0
    %144 = vmatprep.subr.mxu0 0.0
    %145 = vmatpush1.xpose.msra.mxu0 0.0
    %146 = vmatprep.subr.mxu0 0.0
    %147 = vmatpush1.xpose.msra.mxu0 0.0
    %148 = vmatprep.subr.mxu0 0.0
    %149 = vmatpush1.xpose.msra.mxu0 0.0
    %150 = vmatprep.subr.mxu0 0.0
    %151 = vmatpush1.xpose.msra.mxu0 0.0
    %152 = vmatprep.mubr.f32.mxu0 0.0
    %153 = vmatmul.mubr.f32.gmra.mrb[0].mxu0 %v81
    %v154 = vpop.f32.mrb[0].mxu0
    %v155 = vadd.f32 0.0, %v154
    %v156 = vpop.f32.mrb[0].mxu0
    %157 = vmatprep.mubr.f32.mxu0 0.0
    %158 = vmatmul.mubr.f32.gmra.mrb[0].mxu0 %v83
    %v159 = vpop.f32.mrb[0].mxu0
    %v160 = vadd.f32 0.0, %v159
    %v161 = vpop.f32.mrb[0].mxu0
    %162 = vdwg.mxu0
    %v165 = vcombine.high %v155, %v155
    %v167 = vunpack.c.l.s4 1983009808
    %v168 = vunpack.c.0.s8 %v167
    %v169 = vlaneseq
    %v170 = vshrl.u32 %v169, 7
    %v171 = vsub.s32 %v168, %v170
    %v172 = vrot.slane %v155, %v171
    %v174 = vunpack.c.l.s4 1983009808
    %v175 = vunpack.c.0.s8 %v174
    %v176 = vlaneseq
    %v177 = vshrl.u32 %v176, 7
    %v178 = vsub.s32 %v175, %v177
    %v179 = vrot.slane %v165, %v178
    %v180 = vcombine.high %v172, %v172
    %v181 = vcombine.high %v179, %v179
    %v182 = vcombine.high %v160, %v160
    %v184 = vunpack.c.l.s4 1983009808
    %v185 = vunpack.c.0.s8 %v184
    %v186 = vlaneseq
    %v187 = vshrl.u32 %v186, 7
    %v188 = vsub.s32 %v185, %v187
    %v189 = vrot.slane %v160, %v188
    %v191 = vunpack.c.l.s4 1983009808
    %v192 = vunpack.c.0.s8 %v191
    %v193 = vlaneseq
    %v194 = vshrl.u32 %v193, 7
    %v195 = vsub.s32 %v192, %v194
    %v196 = vrot.slane %v182, %v195
    %v197 = vcombine.high %v189, %v189
    %v198 = vcombine.high %v196, %v196
    %vm207 = vcmask 58368
    %v208 = vsel %vm207, %v172, -inf
    %v209 = vsel %vm207, %v180, -inf
    %v210 = vsel %vm207, %v179, -inf
    %v211 = vsel %vm207, %v181, -inf
    %v212 = vsel %vm207, %v189, -inf
    %v213 = vmax.f32 %v208, %v212
    %v214 = vsel %vm207, %v197, -inf
    %v215 = vmax.f32 %v209, %v214
    %v216 = vsel %vm207, %v196, -inf
    %v217 = vmax.f32 %v210, %v216
    %v218 = vsel %vm207, %v198, -inf
    %v219 = vmax.f32 %v211, %v218
    %v220 = vmax.f32 %v213, %v215
    %v221 = vmax.f32 %v217, %v219
    %v222 = vmax.f32 %v220, %v221
    %v223 = vsub.f32 %v172, %v222
    %v224 = vsub.f32 %v180, %v222
    %v225 = vsub.f32 %v179, %v222
    %v226 = vsub.f32 %v181, %v222
    %v227 = vsub.f32 %v189, %v222
    %v228 = vsub.f32 %v197, %v222
    %v229 = vsub.f32 %v196, %v222
    %v230 = vsub.f32 %v198, %v222
    %v231 = vmul.f32 %v223, 1.442695
    %v232 = vpow.pop %v231
    %v233 = vmul.f32 %v224, 1.442695
    %v234 = vpow.pop %v233
    %v235 = vmul.f32 %v225, 1.442695
    %v236 = vpow.pop %v235
    %v237 = vmul.f32 %v226, 1.442695
    %v238 = vpow.pop %v237
    %v239 = vmul.f32 %v227, 1.442695
    %v240 = vpow.pop %v239
    %v241 = vmul.f32 %v228, 1.442695
    %v242 = vpow.pop %v241
    %v243 = vmul.f32 %v229, 1.442695
    %v244 = vpow.pop %v243
    %v245 = vmul.f32 %v230, 1.442695
    %v246 = vpow.pop %v245
    %v247 = vsel %vm207, %v232, 0.0
    %v248 = vsel %vm207, %v234, 0.0
    %v249 = vadd.f32 %v247, %v248
    %v250 = vsel %vm207, %v236, 0.0
    %v251 = vadd.f32 %v249, %v250
    %v252 = vsel %vm207, %v238, 0.0
    %v253 = vadd.f32 %v251, %v252
    %v254 = vsel %vm207, %v240, 0.0
    %v255 = vadd.f32 %v253, %v254
    %v256 = vsel %vm207, %v242, 0.0
    %v257 = vadd.f32 %v255, %v256
    %v258 = vsel %vm207, %v244, 0.0
    %v259 = vadd.f32 %v257, %v258
    %v260 = vsel %vm207, %v246, 0.0
    %v261 = vadd.f32 %v259, %v260
    %v262 = vrcp.pop %v261
    %v263 = vmul.f32 %v232, %v262
    %v264 = vmul.f32 %v234, %v262
    %v265 = vmul.f32 %v236, %v262
    %v266 = vmul.f32 %v238, %v262
    %v267 = vmul.f32 %v240, %v262
    %v268 = vmul.f32 %v242, %v262
    %v269 = vmul.f32 %v244, %v262
    %v270 = vmul.f32 %v246, %v262
    %v271 = vld [vmem:[%s2] sm:$0x1]
    %v272 = vld [vmem:[%s2 + $0x1] sm:$0x1]
    %v273 = vld [vmem:[%s2 + $0x2] sm:$0x1]
    %v274 = vld [vmem:[%s2 + $0x3] sm:$0x1]
    %v275 = vld [vmem:[%s2 + $0x4] sm:$0x1]
    %v276 = vld [vmem:[%s2 + $0x5] sm:$0x1]
    %v277 = vld [vmem:[%s2 + $0x6] sm:$0x1]
    %v278 = vld [vmem:[%s2 + $0x7] sm:$0x1]
    %v279 = vunpack.c.0.s8 %v271
    %v280 = vunpack.c.0.s8 %v272
    %v281 = vunpack.c.0.s8 %v273
    %v282 = vunpack.c.0.s8 %v274
    %v283 = vunpack.c.0.s8 %v275
    %v284 = vunpack.c.0.s8 %v276
    %v285 = vunpack.c.0.s8 %v277
    %v286 = vunpack.c.0.s8 %v278
    %v287 = vcvt.s32.f32 %v279
    %v288 = vcvt.s32.f32 %v280
    %v289 = vcvt.s32.f32 %v281
    %v290 = vcvt.s32.f32 %v282
    %v291 = vcvt.s32.f32 %v283
    %v292 = vcvt.s32.f32 %v284
    %v293 = vcvt.s32.f32 %v285
    %v294 = vcvt.s32.f32 %v286
    %vm295 = vcmp.gt.f32.partialorder %v287, 0.0
    %vm296 = vcmp.gt.f32.partialorder %v288, 0.0
    %vm297 = vcmp.gt.f32.partialorder %v289, 0.0
    %vm298 = vcmp.gt.f32.partialorder %v290, 0.0
    %vm299 = vcmp.gt.f32.partialorder %v291, 0.0
    %vm300 = vcmp.gt.f32.partialorder %v292, 0.0
    %vm301 = vcmp.gt.f32.partialorder %v293, 0.0
    %vm302 = vcmp.gt.f32.partialorder %v294, 0.0
    %v303 = vsel %vm295, 1.0, 1e-10
    %v304 = vsel %vm296, 1.0, 1e-10
    %v305 = vsel %vm297, 1.0, 1e-10
    %v306 = vsel %vm298, 1.0, 1e-10
    %v307 = vsel %vm299, 1.0, 1e-10
    %v308 = vsel %vm300, 1.0, 1e-10
    %v309 = vsel %vm301, 1.0, 1e-10
    %v310 = vsel %vm302, 1.0, 1e-10
    %v311 = vmul.f32 %v263, %v303
    %v312 = vmul.f32 %v264, %v304
    %v313 = vmul.f32 %v265, %v305
    %v314 = vmul.f32 %v266, %v306
    %v315 = vmul.f32 %v267, %v307
    %v316 = vmul.f32 %v268, %v308
    %v317 = vmul.f32 %v269, %v309
    %v318 = vmul.f32 %v270, %v310
    %v319 = vsel %vm207, %v311, 0.0
    %v320 = vsel %vm207, %v312, 0.0
    %v321 = vadd.f32 %v319, %v320
    %v322 = vsel %vm207, %v313, 0.0
    %v323 = vadd.f32 %v321, %v322
    %v324 = vsel %vm207, %v314, 0.0
    %v325 = vadd.f32 %v323, %v324
    %v326 = vsel %vm207, %v315, 0.0
    %v327 = vadd.f32 %v325, %v326
    %v328 = vsel %vm207, %v316, 0.0
    %v329 = vadd.f32 %v327, %v328
    %v330 = vsel %vm207, %v317, 0.0
    %v331 = vadd.f32 %v329, %v330
    %v332 = vsel %vm207, %v318, 0.0
    %v333 = vadd.f32 %v331, %v332
    %v334 = vrcp.pop %v333
    %v335 = vmul.f32 %v311, %v334
    %v336 = vmul.f32 %v312, %v334
    %v337 = vmul.f32 %v313, %v334
    %v338 = vmul.f32 %v314, %v334
    %v339 = vmul.f32 %v315, %v334
    %v340 = vmul.f32 %v316, %v334
    %v341 = vmul.f32 %v317, %v334
    %v342 = vmul.f32 %v318, %v334
    %v343 = vmul.f32 %v335, %v287
    %v344 = vmul.f32 %v336, %v288
    %v345 = vmul.f32 %v337, %v289
    %v346 = vmul.f32 %v338, %v290
    %v347 = vmul.f32 %v339, %v291
    %v348 = vmul.f32 %v340, %v292
    %v349 = vmul.f32 %v341, %v293
    %v350 = vmul.f32 %v342, %v294
    %351 = vst.msk [vmem:[#allocation5] sm:$0x3] %vm207, %v343
    %352 = vst.msk [vmem:[#allocation5 + $0x2] sm:$0x3] %vm207, %v344
    %353 = vst.msk [vmem:[#allocation5 + $0x4] sm:$0x3] %vm207, %v345
    %354 = vst.msk [vmem:[#allocation5 + $0x6] sm:$0x3] %vm207, %v346
    %355 = vst.msk [vmem:[#allocation5 + $0x8] sm:$0x3] %vm207, %v347
    %356 = vst.msk [vmem:[#allocation5 + $0xa] sm:$0x3] %vm207, %v348
    %357 = vst.msk [vmem:[#allocation5 + $0xc] sm:$0x3] %vm207, %v349
    %358 = vst.msk [vmem:[#allocation5 + $0xe] sm:$0x3] %vm207, %v350
    // Predicated region
    $region18: #{tpu_custom_call.1} parent=1 // pred_check
      _
    $region19: #{tpu_custom_call.1} parent=1 // pred_check_branch
      %360 = sbr.rel (0) target = $region21
    $region20: #{tpu_custom_call.1} parent=1 // pred_region
      %s362 = ssub.s32 256, 256
      %363 = vsyncadd [#allocation4], %s362
      %s364 = sshll.u32 [#allocation5], 4
      %s365 = int_to_ptr.vmem [resolvable:$true] %s364
      %370 = dma.vmem_to_hbm [thread:$0]  %s365, 256, %s3, [#allocation4], 32, 32, 2
    $region21: #{tpu_custom_call.1} parent=1 // pred_fallthru
      _
    // Predicated region
    $region22: #{tpu_custom_call.1} parent=1 // pred_check
      _
    $region23: #{tpu_custom_call.1} parent=1 // pred_check_branch
      %372 = sbr.rel (0) target = $region25
    $region24: #{tpu_custom_call.1} parent=1 // pred_region
      %373 = dma.done [#allocation4], 256
    $region25: #{tpu_custom_call.1} parent=1 // pred_fallthru
      _
    %374 = vsyncpa [#allocation3], 1
    %375 = vsyncpa [#allocation4], 1

</llo_original>
